<compile_context>
chip_gen: v7x
topology: tpu7x:2x2x1
jax: 0.10.0
libtpu: 0.0.40
codegen_flags: <defaults>
</compile_context>

<pallas_src>
import jax
import jax.numpy as jnp
from jax.experimental import pallas as pl
from jax.experimental.pallas import tpu as pltpu

EPS = 1e-3       # BatchNorm2d eps=0.001
LANE = 128
TM = 256         # rows (N*OH*OW pixels) per tile; conservative for all of v5e/v6e/v7x.
                 # (Re-tune upward to 512-1024 on v5e/v6e if DMA is exposed; optionally
                 #  add pipeline_mode=pl.Buffered(3) on the patch spec.)


def _round_up(a, b):
    return (a + b - 1) // b * b


def conv_stats_kernel(patch_ref, w_ref, y_ref, sum_ref, sq_ref):
    """Pass 1: conv-as-matmul for one M tile + cross-grid BN statistics accumulation."""
    i = pl.program_id(0)
    y = jnp.dot(patch_ref[...], w_ref[...], preferred_element_type=jnp.float32)
    y_ref[...] = y

    @pl.when(i == 0)
    def _():
        sum_ref[...] = jnp.zeros_like(sum_ref)
        sq_ref[...] = jnp.zeros_like(sq_ref)

    # sum_ref / sq_ref use a constant block index over the grid -> they stay VMEM
    # resident and act as accumulators (grid axis is "arbitrary").
    sum_ref[...] += jnp.sum(y, axis=0, keepdims=True)
    sq_ref[...] += jnp.sum(y * y, axis=0, keepdims=True)


def bn_relu_kernel(y_ref, scale_ref, shift_ref, out_ref):
    """Pass 2: y * scale + shift, then ReLU (scale/shift already fold mean/var/gamma/beta)."""
    out_ref[...] = jnp.maximum(y_ref[...] * scale_ref[...] + shift_ref[...], 0.0)


def basic_conv2d(x, weight, gamma, beta, *, padding=1, mxu_dtype=jnp.bfloat16):
    """x: (N, C, H, W) f32; weight: (OC, C, KH, KW); gamma/beta: (OC,). Stride=1.

    mxu_dtype: dtype of the matmul operands (bf16 recommended on v5e/v6e/v7x; the
    MXU accumulates in f32 and all BN math stays f32).
    """
    N, C, H, W = x.shape
    OC, _, KH, KW = weight.shape
    OH = H + 2 * padding - KH + 1
    OW = W + 2 * padding - KW + 1

    # --- im2col, channels-last (glue, plain JAX): inner order (kh, kw, c) -----------
    x_nhwc = jnp.transpose(x, (0, 2, 3, 1))                      # cheap: input only
    x_pad = jnp.pad(x_nhwc, ((0, 0), (padding, padding), (padding, padding), (0, 0)))
    cols = [x_pad[:, kh:kh + OH, kw:kw + OW, :]
            for kh in range(KH) for kw in range(KW)]             # each (N, OH, OW, C)
    patches = jnp.stack(cols, axis=3).reshape(N * OH * OW, KH * KW * C)
    wmat = jnp.transpose(weight, (2, 3, 1, 0)).reshape(KH * KW * C, OC)

    M, K = N * OH * OW, KH * KW * C
    M_pad = _round_up(M, TM)
    K_pad = _round_up(K, LANE)
    OC_pad = _round_up(OC, LANE)

    # Zero padding keeps the matmul and the (sum / real-M) statistics exact.
    patches_p = jnp.pad(patches, ((0, M_pad - M), (0, K_pad - K))).astype(mxu_dtype)
    wmat_p = jnp.pad(wmat, ((0, K_pad - K), (0, OC_pad - OC))).astype(mxu_dtype)
    gamma_p = jnp.pad(gamma.astype(jnp.float32), (0, OC_pad - OC)).reshape(1, OC_pad)
    beta_p = jnp.pad(beta.astype(jnp.float32), (0, OC_pad - OC)).reshape(1, OC_pad)

    grid = (M_pad // TM,)

    in_bytes = jnp.dtype(mxu_dtype).itemsize
    vmem_est = (2 * TM * K_pad * in_bytes      # double-buffered patch tiles
                + 2 * K_pad * OC_pad * in_bytes  # resident weight (+ headroom)
                + 2 * TM * OC_pad * 4            # double-buffered y tiles
                + 2 * TM * OC_pad * 4            # pass-2 output tiles
                + 8 * OC_pad * 4)                # stats / scale / shift
    vmem_limit = int(min(max(4 * vmem_est, 16 << 20), 48 << 20))  # <= v7x's 64 MiB

    # --- Pass 1: tiled matmul + BN statistics accumulation --------------------------
    y_full, ysum, ysq = pl.pallas_call(
        conv_stats_kernel,
        out_shape=(jax.ShapeDtypeStruct((M_pad, OC_pad), jnp.float32),
                   jax.ShapeDtypeStruct((1, OC_pad), jnp.float32),
                   jax.ShapeDtypeStruct((1, OC_pad), jnp.float32)),
        grid=grid,
        in_specs=[
            pl.BlockSpec((TM, K_pad), lambda i: (i, 0)),
            pl.BlockSpec((K_pad, OC_pad), lambda i: (0, 0)),   # weight stays resident
        ],
        out_specs=(
            pl.BlockSpec((TM, OC_pad), lambda i: (i, 0)),
            pl.BlockSpec((1, OC_pad), lambda i: (0, 0)),       # accumulator block
            pl.BlockSpec((1, OC_pad), lambda i: (0, 0)),       # accumulator block
        ),
        compiler_params=pltpu.CompilerParams(
            dimension_semantics=("arbitrary",),                # M axis carries BN stats
            vmem_limit_bytes=vmem_limit),
    )(patches_p, wmat_p)

    # --- Fold global batch stats into per-channel scale/shift (tiny, plain JAX) -----
    inv_m = jnp.float32(1.0 / M)                               # divide by REAL M
    mean = ysum * inv_m
    var = jnp.maximum(ysq * inv_m - mean * mean, 0.0)          # biased var (PyTorch BN)
    inv_std = jax.lax.rsqrt(var + EPS)
    scale = gamma_p * inv_std
    shift = beta_p - mean * scale

    # --- Pass 2: normalize + ReLU, independent M tiles (parallel across cores) ------
    out = pl.pallas_call(
        bn_relu_kernel,
        out_shape=jax.ShapeDtypeStruct((M_pad, OC_pad), jnp.float32),
        grid=grid,
        in_specs=[
            pl.BlockSpec((TM, OC_pad), lambda i: (i, 0)),
            pl.BlockSpec((1, OC_pad), lambda i: (0, 0)),
            pl.BlockSpec((1, OC_pad), lambda i: (0, 0)),
        ],
        out_specs=pl.BlockSpec((TM, OC_pad), lambda i: (i, 0)),
        compiler_params=pltpu.CompilerParams(
            dimension_semantics=("parallel",),
            vmem_limit_bytes=vmem_limit),
    )(y_full, scale, shift)

    # back to NCHW, dropping M / OC padding
    return out[:M, :OC].reshape(N, OH, OW, OC).transpose(0, 3, 1, 2)


def reference(x, weight, gamma, beta, *, padding=1):
    y = jax.lax.conv_general_dilated(
        x, weight, window_strides=(1, 1),
        padding=[(padding, padding), (padding, padding)],
        dimension_numbers=("NCHW", "OIHW", "NCHW"))
    mean = jnp.mean(y, axis=(0, 2, 3), keepdims=True)
    var = jnp.mean(jnp.square(y - mean), axis=(0, 2, 3), keepdims=True)
    y = (y - mean) * jax.lax.rsqrt(var + EPS)
    y = gamma.reshape(1, -1, 1, 1) * y + beta.reshape(1, -1, 1, 1)
    return jnp.maximum(y, 0.0)


if __name__ == "__main__":
    # BasicConv2d(in_channels=4, out_channels=8, kernel_size=3, padding=1)
    N, C, H, W = 2, 4, 16, 16
    OC, KH, KW = 8, 3, 3

    key = jax.random.PRNGKey(0)
    kx, kw = jax.random.split(key)
    x = jax.random.normal(kx, (N, C, H, W), dtype=jnp.float32)
    weight = 0.1 * jax.random.normal(kw, (OC, C, KH, KW), dtype=jnp.float32)
    gamma = jnp.ones((OC,), dtype=jnp.float32)   # BatchNorm2d affine defaults
    beta = jnp.zeros((OC,), dtype=jnp.float32)

    conv_fn = jax.jit(basic_conv2d, static_argnames=("padding", "mxu_dtype"))
    ref = reference(x, weight, gamma, beta, padding=1)

    # Exact path: f32 MXU operands -> tight tolerance.
    out_f32 = jax.block_until_ready(
        conv_fn(x, weight, gamma, beta, padding=1, mxu_dtype=jnp.float32))
    assert out_f32.shape == (N, OC, H, W), out_f32.shape
    assert jnp.allclose(out_f32, ref, atol=1e-4, rtol=1e-4), \
        float(jnp.max(jnp.abs(out_f32 - ref)))

    # Production path: bf16 MXU operands (f32 accumulation + f32 BN math); looser
    # tolerance only reflects bf16 rounding of the matmul inputs.
    out_bf16 = jax.block_until_ready(
        conv_fn(x, weight, gamma, beta, padding=1, mxu_dtype=jnp.bfloat16))
    assert out_bf16.shape == (N, OC, H, W), out_bf16.shape
    assert jnp.allclose(out_bf16, ref, atol=5e-2, rtol=5e-2), \
        float(jnp.max(jnp.abs(out_bf16 - ref)))

    print("KERNEL_OK")
</pallas_src>

<mosaic_0001>
module attributes {stable_mosaic.version = 11 : i64} {
  func.func @bn_relu_kernel(%arg0: i32, %arg1: memref<256x128xf32, #tpu.memory_space<vmem>>, %arg2: memref<1x128xf32, #tpu.memory_space<vmem>>, %arg3: memref<1x128xf32, #tpu.memory_space<vmem>>, %arg4: memref<256x128xf32, #tpu.memory_space<vmem>>) attributes {dimension_semantics = [#tpu.dimension_semantics<parallel>], iteration_bounds = array<i64: 2>, scalar_prefetch = 0 : i64, scratch_operands = 0 : i64, tpu.core_type = #tpu.core_type<tc>, window_params = [{transform_indices = @transform_0, window_bounds = array<i64: 256, 128>}, {pipeline_mode = #tpu.pipeline_mode<synchronous>, transform_indices = @transform_1, window_bounds = array<i64: 1, 128>}, {pipeline_mode = #tpu.pipeline_mode<synchronous>, transform_indices = @transform_2, window_bounds = array<i64: 1, 128>}, {transform_indices = @transform_3, window_bounds = array<i64: 256, 128>}]} {
    %c0 = arith.constant 0 : index
    %c0_0 = arith.constant 0 : index
    %0 = vector.load %arg1[%c0, %c0_0] : memref<256x128xf32, #tpu.memory_space<vmem>>, vector<256x128xf32>
    %c0_1 = arith.constant 0 : index
    %c0_2 = arith.constant 0 : index
    %1 = vector.load %arg2[%c0_1, %c0_2] : memref<1x128xf32, #tpu.memory_space<vmem>>, vector<1x128xf32>
    %2 = vector.broadcast %1 : vector<1x128xf32> to vector<256x128xf32>
    %3 = arith.mulf %0, %2 : vector<256x128xf32>
    %c0_3 = arith.constant 0 : index
    %c0_4 = arith.constant 0 : index
    %4 = vector.load %arg3[%c0_3, %c0_4] : memref<1x128xf32, #tpu.memory_space<vmem>>, vector<1x128xf32>
    %5 = vector.broadcast %4 : vector<1x128xf32> to vector<256x128xf32>
    %6 = arith.addf %3, %5 : vector<256x128xf32>
    %cst = arith.constant 0.000000e+00 : f32
    %7 = vector.broadcast %cst : f32 to vector<256x128xf32>
    %8 = arith.maximumf %6, %7 : vector<256x128xf32>
    %c0_5 = arith.constant 0 : index
    %c0_6 = arith.constant 0 : index
    %9 = vector.load %arg4[%c0_5, %c0_6] : memref<256x128xf32, #tpu.memory_space<vmem>>, vector<256x128xf32>
    tpu.vector_store %arg4[%c0_5, %c0_6], %8 {strides = array<i32>} : memref<256x128xf32, #tpu.memory_space<vmem>>, vector<256x128xf32>,
    return
  }
  func.func @transform_0(%arg0: i32) -> (i32, i32) {
    %c0_i32 = arith.constant 0 : i32
    %c0_i32_0 = arith.constant 0 : i32
    return %arg0, %c0_i32 : i32, i32
  }
  func.func @transform_1(%arg0: i32) -> (i32, i32) {
    %c0_i32 = arith.constant 0 : i32
    %c0_i32_0 = arith.constant 0 : i32
    %c0_i32_1 = arith.constant 0 : i32
    return %c0_i32, %c0_i32_0 : i32, i32
  }
  func.func @transform_2(%arg0: i32) -> (i32, i32) {
    %c0_i32 = arith.constant 0 : i32
    %c0_i32_0 = arith.constant 0 : i32
    %c0_i32_1 = arith.constant 0 : i32
    return %c0_i32, %c0_i32_0 : i32, i32
  }
  func.func @transform_3(%arg0: i32) -> (i32, i32) {
    %c0_i32 = arith.constant 0 : i32
    %c0_i32_0 = arith.constant 0 : i32
    return %arg0, %c0_i32 : i32, i32
  }
}

module attributes {stable_mosaic.version = 11 : i64} {
  func.func @conv_stats_kernel(%arg0: i32, %arg1: memref<256x128xf32, #tpu.memory_space<vmem>>, %arg2: memref<128x128xf32, #tpu.memory_space<vmem>>, %arg3: memref<256x128xf32, #tpu.memory_space<vmem>>, %arg4: memref<1x128xf32, #tpu.memory_space<vmem>>, %arg5: memref<1x128xf32, #tpu.memory_space<vmem>>) attributes {dimension_semantics = [#tpu.dimension_semantics<arbitrary>], iteration_bounds = array<i64: 2>, scalar_prefetch = 0 : i64, scratch_operands = 0 : i64, tpu.core_type = #tpu.core_type<tc>, window_params = [{transform_indices = @transform_0, window_bounds = array<i64: 256, 128>}, {pipeline_mode = #tpu.pipeline_mode<synchronous>, transform_indices = @transform_1, window_bounds = array<i64: 128, 128>}, {transform_indices = @transform_2, window_bounds = array<i64: 256, 128>}, {pipeline_mode = #tpu.pipeline_mode<synchronous>, transform_indices = @transform_3, window_bounds = array<i64: 1, 128>}, {pipeline_mode = #tpu.pipeline_mode<synchronous>, transform_indices = @transform_4, window_bounds = array<i64: 1, 128>}]} {
    %c0 = arith.constant 0 : index
    %c0_0 = arith.constant 0 : index
    %0 = vector.load %arg1[%c0, %c0_0] : memref<256x128xf32, #tpu.memory_space<vmem>>, vector<256x128xf32>
    %c0_1 = arith.constant 0 : index
    %c0_2 = arith.constant 0 : index
    %1 = vector.load %arg2[%c0_1, %c0_2] : memref<128x128xf32, #tpu.memory_space<vmem>>, vector<128x128xf32>
    %cst = arith.constant dense<0.000000e+00> : vector<256x128xf32>
    %2 = tpu.matmul %0, %1, %cst {dimension_numbers = #tpu.dot_dimension_numbers<[1], [0], [0], [1], [0, 0, 1, 1], [], []>} : vector<256x128xf32>, vector<128x128xf32>, vector<256x128xf32> -> vector<256x128xf32>
    %c0_3 = arith.constant 0 : index
    %c0_4 = arith.constant 0 : index
    %3 = vector.load %arg3[%c0_3, %c0_4] : memref<256x128xf32, #tpu.memory_space<vmem>>, vector<256x128xf32>
    tpu.vector_store %arg3[%c0_3, %c0_4], %2 {strides = array<i32>} : memref<256x128xf32, #tpu.memory_space<vmem>>, vector<256x128xf32>,
    %c0_i32 = arith.constant 0 : i32
    %4 = arith.cmpi eq, %arg0, %c0_i32 : i32
    %5 = arith.extui %4 : i1 to i32
    %c0_i32_5 = arith.constant 0 : i32
    %6 = arith.cmpi ne, %5, %c0_i32_5 : i32
    scf.if %6 {
      %cst_16 = arith.constant 0.000000e+00 : f32
      %18 = vector.broadcast %cst_16 : f32 to vector<1x128xf32>
      %c0_17 = arith.constant 0 : index
      %c0_18 = arith.constant 0 : index
      %19 = vector.load %arg4[%c0_17, %c0_18] : memref<1x128xf32, #tpu.memory_space<vmem>>, vector<1x128xf32>
      tpu.vector_store %arg4[%c0_17, %c0_18], %18 {strides = array<i32>} : memref<1x128xf32, #tpu.memory_space<vmem>>, vector<1x128xf32>,
      %cst_19 = arith.constant 0.000000e+00 : f32
      %20 = vector.broadcast %cst_19 : f32 to vector<1x128xf32>
      %c0_20 = arith.constant 0 : index
      %c0_21 = arith.constant 0 : index
      %21 = vector.load %arg5[%c0_20, %c0_21] : memref<1x128xf32, #tpu.memory_space<vmem>>, vector<1x128xf32>
      tpu.vector_store %arg5[%c0_20, %c0_21], %20 {strides = array<i32>} : memref<1x128xf32, #tpu.memory_space<vmem>>, vector<1x128xf32>,
    } else {
    }
    %c0_6 = arith.constant 0 : index
    %c0_7 = arith.constant 0 : index
    %7 = vector.load %arg4[%c0_6, %c0_7] : memref<1x128xf32, #tpu.memory_space<vmem>>, vector<1x128xf32>
    %cst_8 = arith.constant dense<0.000000e+00> : vector<128xf32>
    %8 = vector.multi_reduction <add>, %2, %cst_8 [0] : vector<256x128xf32> to vector<128xf32>
    %9 = vector.shape_cast %8 : vector<128xf32> to vector<1x128xf32>
    %10 = arith.addf %7, %9 : vector<1x128xf32>
    %c0_9 = arith.constant 0 : index
    %c0_10 = arith.constant 0 : index
    %11 = vector.load %arg4[%c0_9, %c0_10] : memref<1x128xf32, #tpu.memory_space<vmem>>, vector<1x128xf32>
    tpu.vector_store %arg4[%c0_9, %c0_10], %10 {strides = array<i32>} : memref<1x128xf32, #tpu.memory_space<vmem>>, vector<1x128xf32>,
    %c0_11 = arith.constant 0 : index
    %c0_12 = arith.constant 0 : index
    %12 = vector.load %arg5[%c0_11, %c0_12] : memref<1x128xf32, #tpu.memory_space<vmem>>, vector<1x128xf32>
    %13 = arith.mulf %2, %2 : vector<256x128xf32>
    %cst_13 = arith.constant dense<0.000000e+00> : vector<128xf32>
    %14 = vector.multi_reduction <add>, %13, %cst_13 [0] : vector<256x128xf32> to vector<128xf32>
    %15 = vector.shape_cast %14 : vector<128xf32> to vector<1x128xf32>
    %16 = arith.addf %12, %15 : vector<1x128xf32>
    %c0_14 = arith.constant 0 : index
    %c0_15 = arith.constant 0 : index
    %17 = vector.load %arg5[%c0_14, %c0_15] : memref<1x128xf32, #tpu.memory_space<vmem>>, vector<1x128xf32>
    tpu.vector_store %arg5[%c0_14, %c0_15], %16 {strides = array<i32>} : memref<1x128xf32, #tpu.memory_space<vmem>>, vector<1x128xf32>,
    return
  }
  func.func @transform_0(%arg0: i32) -> (i32, i32) {
    %c0_i32 = arith.constant 0 : i32
    %c0_i32_0 = arith.constant 0 : i32
    return %arg0, %c0_i32 : i32, i32
  }
  func.func @transform_1(%arg0: i32) -> (i32, i32) {
    %c0_i32 = arith.constant 0 : i32
    %c0_i32_0 = arith.constant 0 : i32
    %c0_i32_1 = arith.constant 0 : i32
    return %c0_i32, %c0_i32_0 : i32, i32
  }
  func.func @transform_2(%arg0: i32) -> (i32, i32) {
    %c0_i32 = arith.constant 0 : i32
    %c0_i32_0 = arith.constant 0 : i32
    return %arg0, %c0_i32 : i32, i32
  }
  func.func @transform_3(%arg0: i32) -> (i32, i32) {
    %c0_i32 = arith.constant 0 : i32
    %c0_i32_0 = arith.constant 0 : i32
    %c0_i32_1 = arith.constant 0 : i32
    return %c0_i32, %c0_i32_0 : i32, i32
  }
  func.func @transform_4(%arg0: i32) -> (i32, i32) {
    %c0_i32 = arith.constant 0 : i32
    %c0_i32_0 = arith.constant 0 : i32
    %c0_i32_1 = arith.constant 0 : i32
    return %c0_i32, %c0_i32_0 : i32, i32
  }
}

</mosaic_0001>

<llo_original>
// kernel: basic_conv2d.3
$region0: #{basic_conv2d.3}
  #allocation0 [shape = 'u32[]', space=smem, size = 0x4, offset = 0x4, fixed_abs, tag = 'smem constant byte address 0x4 - core index']
  #allocation1 [shape = 'u32[144,128]{1,0:T(1,128)}', space=vmem, size = 0x12000, scoped, tag = 'internal scratch']
  %s0 = inlined_call_operand.vmem [shape: f32[512,128], index: 0, kind: input, shape index: {}]
  %s1 = inlined_call_operand.vmem [shape: f32[1,128], index: 1, kind: input, shape index: {}]
  %s2 = inlined_call_operand.vmem [shape: f32[1,128], index: 2, kind: input, shape index: {}]
  %s3 = inlined_call_operand.vmem [shape: f32[512,128], index: 3, kind: output, shape index: {}]
  %s4 = sld [smem:[#allocation0]]
  $region45: #{basic_conv2d.3} parent=0
    _
  %s6 = ssub.s32 1, %s4
  %s7 = scalar_select 0, %s6, %s4
  loop: start=0, step=1, limit=4
  $region2: #{basic_conv2d.3} parent=0 // loop_pre_header
    _
  $region3: #{basic_conv2d.3} parent=0 // loop_header
    %s9 = sphi 0, %s13
    %p10 = scmp.ge.s32.totalorder %s9, 4
    %s19 = sphi 0, %s21
    %s22 = sphi 0, %s19
    %s23 = sphi 0, %s22
    %s39 = sphi 0, %s23
    %s43 = sphi 0, %s43
    %s45 = sphi 0, %s43
    %s46 = sphi 0, %s45
    %s60 = sphi 0, %s46
    %s64 = sphi 0, %s64
    %s66 = sphi 0, %s64
    %s67 = sphi 0, %s66
    %s81 = sphi 0, %s67
    %s87 = sphi 0, %s89
    %s90 = sphi 0, %s87
    %s91 = sphi 0, %s90
    %s107 = sphi 0, %s91
  $region4: #{basic_conv2d.3} parent=0 // loop_header_branch
    %12 = sbr.rel (%p10) target = $region8
  $region5: #{basic_conv2d.3} parent=0 // loop_body
    %s14 = ssub.s32 %s9, 1
    %s15 = ssub.s32 %s9, 2
    %s16 = sadd.s32 %s9, 1
    %s17 = ssub.s32 %s9, %s16
    %p18 = scmp.eq.s32.totalorder %s17, 0
    %s20 = sadd.s32 %s19, 1
    %s21 = scalar_select %p18, %s19, %s20
    %p24 = pneg %p18
    %p25 = scmp.eq.s32.totalorder %s9, 1
    %p26 = por %p24, %p25
    %p27 = scmp.ne.s32.totalorder %s19, %s22
    %p28 = scmp.eq.s32.totalorder %s9, 0
    %p29 = por %p27, %p28
    %p30 = scmp.ne.s32.totalorder %s19, %s22
    %p31 = scmp.eq.s32.totalorder %s14, 1
    %p32 = por %p30, %p31
    %p33 = scmp.ne.s32.totalorder %s22, %s23
    %p34 = scmp.eq.s32.totalorder %s14, 0
    %p35 = por %p33, %p34
    %p36 = scmp.ne.s32.totalorder %s22, %s23
    %p37 = scmp.eq.s32.totalorder %s15, 1
    %p38 = por %p36, %p37
    %p40 = scmp.ne.s32.totalorder %s23, %s39
    %p41 = scmp.eq.s32.totalorder %s15, 0
    %p42 = por %p40, %p41
    %s44 = sadd.s32 %s43, 1
    %p47 = scmp.eq.s32.totalorder %s9, 1
    %p48 = scmp.ne.s32.totalorder %s43, %s45
    %p49 = scmp.eq.s32.totalorder %s9, 0
    %p50 = por %p48, %p49
    %p51 = scmp.ne.s32.totalorder %s43, %s45
    %p52 = scmp.eq.s32.totalorder %s14, 1
    %p53 = por %p51, %p52
    %p54 = scmp.ne.s32.totalorder %s45, %s46
    %p55 = scmp.eq.s32.totalorder %s14, 0
    %p56 = por %p54, %p55
    %p57 = scmp.ne.s32.totalorder %s45, %s46
    %p58 = scmp.eq.s32.totalorder %s15, 1
    %p59 = por %p57, %p58
    %p61 = scmp.ne.s32.totalorder %s46, %s60
    %p62 = scmp.eq.s32.totalorder %s15, 0
    %p63 = por %p61, %p62
    %s65 = sadd.s32 %s64, 1
    %p68 = scmp.eq.s32.totalorder %s9, 1
    %p69 = scmp.ne.s32.totalorder %s64, %s66
    %p70 = scmp.eq.s32.totalorder %s9, 0
    %p71 = por %p69, %p70
    %p72 = scmp.ne.s32.totalorder %s64, %s66
    %p73 = scmp.eq.s32.totalorder %s14, 1
    %p74 = por %p72, %p73
    %p75 = scmp.ne.s32.totalorder %s66, %s67
    %p76 = scmp.eq.s32.totalorder %s14, 0
    %p77 = por %p75, %p76
    %p78 = scmp.ne.s32.totalorder %s66, %s67
    %p79 = scmp.eq.s32.totalorder %s15, 1
    %p80 = por %p78, %p79
    %p82 = scmp.ne.s32.totalorder %s67, %s81
    %p83 = scmp.eq.s32.totalorder %s15, 0
    %p84 = por %p82, %p83
    %s85 = ssub.s32 %s9, %s16
    %p86 = scmp.eq.s32.totalorder %s85, 0
    %s88 = sadd.s32 %s87, 1
    %s89 = scalar_select %p86, %s87, %s88
    %p92 = pneg %p86
    %p93 = scmp.eq.s32.totalorder %s9, 1
    %p94 = por %p92, %p93
    %p95 = scmp.ne.s32.totalorder %s87, %s90
    %p96 = scmp.eq.s32.totalorder %s9, 0
    %p97 = por %p95, %p96
    %p98 = scmp.ne.s32.totalorder %s87, %s90
    %p99 = scmp.eq.s32.totalorder %s14, 1
    %p100 = por %p98, %p99
    %p101 = scmp.ne.s32.totalorder %s90, %s91
    %p102 = scmp.eq.s32.totalorder %s14, 0
    %p103 = por %p101, %p102
    %p104 = scmp.ne.s32.totalorder %s90, %s91
    %p105 = scmp.eq.s32.totalorder %s15, 1
    %p106 = por %p104, %p105
    %p108 = scmp.ne.s32.totalorder %s91, %s107
    %p109 = scmp.eq.s32.totalorder %s15, 0
    %p110 = por %p108, %p109
    %p111 = scmp.le.s32.totalorder 1, %s9
    %p112 = scmp.lt.s32.totalorder %s9, 3
    %p113 = pnand %p111, %p112
    %p114 = pneg %p113
    // Predicated region
    $region9: #{basic_conv2d.3} parent=5 // pred_check
      _
    $region10: #{basic_conv2d.3} parent=5 // pred_check_branch
      %116 = sbr.rel (%p113) target = $region12
    $region11: #{basic_conv2d.3} parent=5 // pred_region
      %s117 = ssub.s32 %s9, 1
      // Predicated region
      $region13: #{basic_conv2d.3} parent=11 // pred_check
        %p118 = pneg %p56
      $region14: #{basic_conv2d.3} parent=11 // pred_check_branch
        %120 = sbr.rel (%p118) target = $region16
      $region15: #{basic_conv2d.3} parent=11 // pred_region
        _
      $region16: #{basic_conv2d.3} parent=11 // pred_fallthru
        _
      // Predicated region
      $region17: #{basic_conv2d.3} parent=11 // pred_check
        %p121 = pneg %p77
      $region18: #{basic_conv2d.3} parent=11 // pred_check_branch
        %123 = sbr.rel (%p121) target = $region20
      $region19: #{basic_conv2d.3} parent=11 // pred_region
        _
      $region20: #{basic_conv2d.3} parent=11 // pred_fallthru
        _
    $region12: #{basic_conv2d.3} parent=5 // pred_fallthru
      _
    %p124 = scmp.lt.s32.totalorder %s9, 2
    // Predicated region
    $region21: #{basic_conv2d.3} parent=5 // pred_check
      %p125 = pneg %p124
    $region22: #{basic_conv2d.3} parent=5 // pred_check_branch
      %127 = sbr.rel (%p125) target = $region24
    $region23: #{basic_conv2d.3} parent=5 // pred_region
      // Predicated region
      $region25: #{basic_conv2d.3} parent=23 // pred_check
        %p128 = pneg %p29
      $region26: #{basic_conv2d.3} parent=23 // pred_check_branch
        %130 = sbr.rel (%p128) target = $region28
      $region27: #{basic_conv2d.3} parent=23 // pred_region
        %s131 = smul.u32 32, %s9
        %p132 = scmp.lt.s32.totalorder %s131, 63
        %s133 = scalar_select %p132, %s131, 63
        %s134 = smul.addr %s133, 8
        %s135 = scalar_lea.vmem %s0, %s134
        %s136 = smul.u32 32, %s9
      $region28: #{basic_conv2d.3} parent=23 // pred_fallthru
        _
    $region24: #{basic_conv2d.3} parent=5 // pred_fallthru
      _
    %p137 = scmp.le.s32.totalorder 1, %s9
    %p138 = scmp.lt.s32.totalorder %s9, 3
    %p139 = pnand %p137, %p138
    %p140 = pneg %p139
    // Predicated region
    $region29: #{basic_conv2d.3} parent=5 // pred_check
      _
    $region30: #{basic_conv2d.3} parent=5 // pred_check_branch
      %142 = sbr.rel (%p139) target = $region32
    $region31: #{basic_conv2d.3} parent=5 // pred_region
      %s143 = ssub.s32 %s9, 1
      %s144 = smul.u32 32, %s14
      %p145 = scmp.lt.s32.totalorder %s144, 63
      %s146 = scalar_select %p145, %s144, 63
      %s147 = smul.addr %s146, 8
      %s148 = scalar_lea.vmem %s0, %s147
      %p149 = pneg %p35
      %p150 = pneg %p32
      %p151 = pneg %p56
      %p152 = pneg %p53
      %p153 = pneg %p77
      %p154 = pneg %p74
      %p155 = pneg %p103
      %p156 = pneg %p100
      %s157 = smul.u32 32, %s14
      %p158 = scmp.lt.s32.totalorder %s157, 63
      %s159 = scalar_select %p158, %s157, 63
      %s160 = smul.addr %s159, 8
      %s161 = scalar_lea.vmem %s3, %s160
      %s162 = smul.u32 32, %s14
      %p163 = scmp.lt.s32.totalorder %s162, 63
      %s164 = scalar_select %p163, %s162, 63
      %s165 = smul.addr %s164, 8
      %s166 = scalar_lea.vmem %s0, %s165
      %s167 = smul.u32 32, %s14
      %s168 = smul.u32 32, %s14
      %p169 = scmp.lt.s32.totalorder %s168, 63
      %s170 = scalar_select %p169, %s168, 63
      %s171 = smul.addr %s170, 8
      %s172 = scalar_lea.vmem %s3, %s171
      %s173 = smul.u32 32, %s14
      %v174 = vld [vmem:[%s166] sm:$0xff]
      %v175 = vld [vmem:[%s166 + $0x8] sm:$0xff]
      %v176 = vld [vmem:[%s166 + $0x10] sm:$0xff]
      %v177 = vld [vmem:[%s166 + $0x18] sm:$0xff]
      %v178 = vld [vmem:[%s166 + $0x20] sm:$0xff]
      %v179 = vld [vmem:[%s166 + $0x28] sm:$0xff]
      %v180 = vld [vmem:[%s166 + $0x30] sm:$0xff]
      %v181 = vld [vmem:[%s166 + $0x38] sm:$0xff]
      %v182 = vld [vmem:[%s166 + $0x40] sm:$0xff]
      %v183 = vld [vmem:[%s166 + $0x48] sm:$0xff]
      %v184 = vld [vmem:[%s166 + $0x50] sm:$0xff]
      %v185 = vld [vmem:[%s166 + $0x58] sm:$0xff]
      %v186 = vld [vmem:[%s166 + $0x60] sm:$0xff]
      %v187 = vld [vmem:[%s166 + $0x68] sm:$0xff]
      %v188 = vld [vmem:[%s166 + $0x70] sm:$0xff]
      %v189 = vld [vmem:[%s166 + $0x78] sm:$0xff]
      %v190 = vld [vmem:[%s166 + $0x80] sm:$0xff]
      %v191 = vld [vmem:[%s166 + $0x88] sm:$0xff]
      %v192 = vld [vmem:[%s166 + $0x90] sm:$0xff]
      %v193 = vld [vmem:[%s166 + $0x98] sm:$0xff]
      %v194 = vld [vmem:[%s166 + $0xa0] sm:$0xff]
      %v195 = vld [vmem:[%s166 + $0xa8] sm:$0xff]
      %v196 = vld [vmem:[%s166 + $0xb0] sm:$0xff]
      %v197 = vld [vmem:[%s166 + $0xb8] sm:$0xff]
      %v198 = vld [vmem:[%s166 + $0xc0] sm:$0xff]
      %v199 = vld [vmem:[%s166 + $0xc8] sm:$0xff]
      %v200 = vld [vmem:[%s166 + $0xd0] sm:$0xff]
      %v201 = vld [vmem:[%s166 + $0xd8] sm:$0xff]
      %v202 = vld [vmem:[%s166 + $0xe0] sm:$0xff]
      %v203 = vld [vmem:[%s166 + $0xe8] sm:$0xff]
      %v204 = vld [vmem:[%s166 + $0xf0] sm:$0xff]
      %v205 = vld [vmem:[%s166 + $0xf8] sm:$0xff]
      %v206 = vld [vmem:[%s1] sm:$0x1]
      %v208 = vlaneseq
      %v209 = vshrl.u32 %v208, 7
      %v210 = vsub.s32 0, %v209
      %v211 = vrot.slane %v206, %v210
      %v213 = vmul.f32 %v174, %v211
      %v214 = vmul.f32 %v175, %v211
      %v215 = vmul.f32 %v176, %v211
      %v216 = vmul.f32 %v177, %v211
      %v217 = vmul.f32 %v178, %v211
      %v218 = vmul.f32 %v179, %v211
      %v219 = vmul.f32 %v180, %v211
      %v220 = vmul.f32 %v181, %v211
      %v221 = vmul.f32 %v182, %v211
      %v222 = vmul.f32 %v183, %v211
      %v223 = vmul.f32 %v184, %v211
      %v224 = vmul.f32 %v185, %v211
      %v225 = vmul.f32 %v186, %v211
      %v226 = vmul.f32 %v187, %v211
      %v227 = vmul.f32 %v188, %v211
      %v228 = vmul.f32 %v189, %v211
      %v229 = vmul.f32 %v190, %v211
      %v230 = vmul.f32 %v191, %v211
      %v231 = vmul.f32 %v192, %v211
      %v232 = vmul.f32 %v193, %v211
      %v233 = vmul.f32 %v194, %v211
      %v234 = vmul.f32 %v195, %v211
      %v235 = vmul.f32 %v196, %v211
      %v236 = vmul.f32 %v197, %v211
      %v237 = vmul.f32 %v198, %v211
      %v238 = vmul.f32 %v199, %v211
      %v239 = vmul.f32 %v200, %v211
      %v240 = vmul.f32 %v201, %v211
      %v241 = vmul.f32 %v202, %v211
      %v242 = vmul.f32 %v203, %v211
      %v243 = vmul.f32 %v204, %v211
      %v244 = vmul.f32 %v205, %v211
      %v245 = vld [vmem:[%s2] sm:$0x1]
      %v247 = vlaneseq
      %v248 = vshrl.u32 %v247, 7
      %v249 = vsub.s32 0, %v248
      %v250 = vrot.slane %v245, %v249
      %v252 = vadd.f32 %v213, %v250
      %v253 = vadd.f32 %v214, %v250
      %v254 = vadd.f32 %v215, %v250
      %v255 = vadd.f32 %v216, %v250
      %v256 = vadd.f32 %v217, %v250
      %v257 = vadd.f32 %v218, %v250
      %v258 = vadd.f32 %v219, %v250
      %v259 = vadd.f32 %v220, %v250
      %v260 = vadd.f32 %v221, %v250
      %v261 = vadd.f32 %v222, %v250
      %v262 = vadd.f32 %v223, %v250
      %v263 = vadd.f32 %v224, %v250
      %v264 = vadd.f32 %v225, %v250
      %v265 = vadd.f32 %v226, %v250
      %v266 = vadd.f32 %v227, %v250
      %v267 = vadd.f32 %v228, %v250
      %v268 = vadd.f32 %v229, %v250
      %v269 = vadd.f32 %v230, %v250
      %v270 = vadd.f32 %v231, %v250
      %v271 = vadd.f32 %v232, %v250
      %v272 = vadd.f32 %v233, %v250
      %v273 = vadd.f32 %v234, %v250
      %v274 = vadd.f32 %v235, %v250
      %v275 = vadd.f32 %v236, %v250
      %v276 = vadd.f32 %v237, %v250
      %v277 = vadd.f32 %v238, %v250
      %v278 = vadd.f32 %v239, %v250
      %v279 = vadd.f32 %v240, %v250
      %v280 = vadd.f32 %v241, %v250
      %v281 = vadd.f32 %v242, %v250
      %v282 = vadd.f32 %v243, %v250
      %v283 = vadd.f32 %v244, %v250
      %v284 = vmax.f32 %v252, 0.0
      %v285 = vmax.f32 %v253, 0.0
      %v286 = vmax.f32 %v254, 0.0
      %v287 = vmax.f32 %v255, 0.0
      %v288 = vmax.f32 %v256, 0.0
      %v289 = vmax.f32 %v257, 0.0
      %v290 = vmax.f32 %v258, 0.0
      %v291 = vmax.f32 %v259, 0.0
      %v292 = vmax.f32 %v260, 0.0
      %v293 = vmax.f32 %v261, 0.0
      %v294 = vmax.f32 %v262, 0.0
      %v295 = vmax.f32 %v263, 0.0
      %v296 = vmax.f32 %v264, 0.0
      %v297 = vmax.f32 %v265, 0.0
      %v298 = vmax.f32 %v266, 0.0
      %v299 = vmax.f32 %v267, 0.0
      %v300 = vmax.f32 %v268, 0.0
      %v301 = vmax.f32 %v269, 0.0
      %v302 = vmax.f32 %v270, 0.0
      %v303 = vmax.f32 %v271, 0.0
      %v304 = vmax.f32 %v272, 0.0
      %v305 = vmax.f32 %v273, 0.0
      %v306 = vmax.f32 %v274, 0.0
      %v307 = vmax.f32 %v275, 0.0
      %v308 = vmax.f32 %v276, 0.0
      %v309 = vmax.f32 %v277, 0.0
      %v310 = vmax.f32 %v278, 0.0
      %v311 = vmax.f32 %v279, 0.0
      %v312 = vmax.f32 %v280, 0.0
      %v313 = vmax.f32 %v281, 0.0
      %v314 = vmax.f32 %v282, 0.0
      %v315 = vmax.f32 %v283, 0.0
      %316 = vst [vmem:[%s172] sm:$0xff] %v284
      %317 = vst [vmem:[%s172 + $0x8] sm:$0xff] %v285
      %318 = vst [vmem:[%s172 + $0x10] sm:$0xff] %v286
      %319 = vst [vmem:[%s172 + $0x18] sm:$0xff] %v287
      %320 = vst [vmem:[%s172 + $0x20] sm:$0xff] %v288
      %321 = vst [vmem:[%s172 + $0x28] sm:$0xff] %v289
      %322 = vst [vmem:[%s172 + $0x30] sm:$0xff] %v290
      %323 = vst [vmem:[%s172 + $0x38] sm:$0xff] %v291
      %324 = vst [vmem:[%s172 + $0x40] sm:$0xff] %v292
      %325 = vst [vmem:[%s172 + $0x48] sm:$0xff] %v293
      %326 = vst [vmem:[%s172 + $0x50] sm:$0xff] %v294
      %327 = vst [vmem:[%s172 + $0x58] sm:$0xff] %v295
      %328 = vst [vmem:[%s172 + $0x60] sm:$0xff] %v296
      %329 = vst [vmem:[%s172 + $0x68] sm:$0xff] %v297
      %330 = vst [vmem:[%s172 + $0x70] sm:$0xff] %v298
      %331 = vst [vmem:[%s172 + $0x78] sm:$0xff] %v299
      %332 = vst [vmem:[%s172 + $0x80] sm:$0xff] %v300
      %333 = vst [vmem:[%s172 + $0x88] sm:$0xff] %v301
      %334 = vst [vmem:[%s172 + $0x90] sm:$0xff] %v302
      %335 = vst [vmem:[%s172 + $0x98] sm:$0xff] %v303
      %336 = vst [vmem:[%s172 + $0xa0] sm:$0xff] %v304
      %337 = vst [vmem:[%s172 + $0xa8] sm:$0xff] %v305
      %338 = vst [vmem:[%s172 + $0xb0] sm:$0xff] %v306
      %339 = vst [vmem:[%s172 + $0xb8] sm:$0xff] %v307
      %340 = vst [vmem:[%s172 + $0xc0] sm:$0xff] %v308
      %341 = vst [vmem:[%s172 + $0xc8] sm:$0xff] %v309
      %342 = vst [vmem:[%s172 + $0xd0] sm:$0xff] %v310
      %343 = vst [vmem:[%s172 + $0xd8] sm:$0xff] %v311
      %344 = vst [vmem:[%s172 + $0xe0] sm:$0xff] %v312
      %345 = vst [vmem:[%s172 + $0xe8] sm:$0xff] %v313
      %346 = vst [vmem:[%s172 + $0xf0] sm:$0xff] %v314
      %347 = vst [vmem:[%s172 + $0xf8] sm:$0xff] %v315
      %s348 = smul.u32 32, %s14
      %p349 = scmp.lt.s32.totalorder %s348, 63
      %s350 = scalar_select %p349, %s348, 63
      %s351 = smul.addr %s350, 8
      %s352 = scalar_lea.vmem %s3, %s351
      // Predicated region
      $region33: #{basic_conv2d.3} parent=31 // pred_check
        %p353 = pneg %p100
      $region34: #{basic_conv2d.3} parent=31 // pred_check_branch
        %355 = sbr.rel (%p353) target = $region36
      $region35: #{basic_conv2d.3} parent=31 // pred_region
        %s356 = smul.u32 32, %s14
      $region36: #{basic_conv2d.3} parent=31 // pred_fallthru
        _
    $region32: #{basic_conv2d.3} parent=5 // pred_fallthru
      _
    %p357 = scmp.le.s32.totalorder 2, %s9
    // Predicated region
    $region37: #{basic_conv2d.3} parent=5 // pred_check
      %p358 = pneg %p357
    $region38: #{basic_conv2d.3} parent=5 // pred_check_branch
      %360 = sbr.rel (%p358) target = $region40
    $region39: #{basic_conv2d.3} parent=5 // pred_region
      %s361 = ssub.s32 %s9, 2
      // Predicated region
      $region41: #{basic_conv2d.3} parent=39 // pred_check
        %p362 = pneg %p106
      $region42: #{basic_conv2d.3} parent=39 // pred_check_branch
        %364 = sbr.rel (%p362) target = $region44
      $region43: #{basic_conv2d.3} parent=39 // pred_region
        %s365 = smul.u32 32, %s15
        %p366 = scmp.lt.s32.totalorder %s365, 63
        %s367 = scalar_select %p366, %s365, 63
        %s368 = smul.addr %s367, 8
        %s369 = scalar_lea.vmem %s3, %s368
      $region44: #{basic_conv2d.3} parent=39 // pred_fallthru
        _
    $region40: #{basic_conv2d.3} parent=5 // pred_fallthru
      _
  $region6: #{basic_conv2d.3} parent=0 // loop_footer
    %s13 = sadd.s32 1, %s9
  $region7: #{basic_conv2d.3} parent=0 // loop_footer_branch
    %8 = sbr.rel target = $region3
  $region8: #{basic_conv2d.3} parent=0 // loop_exit
    _

// kernel: basic_conv2d.2
$region0: #{basic_conv2d.2}
  #allocation0 [shape = 'u32[]', space=smem, size = 0x4, offset = 0x4, fixed_abs, tag = 'smem constant byte address 0x4 - core index']
  #allocation1 [shape = 'u32[144,128]{1,0:T(1,128)}', space=vmem, size = 0x12000, scoped, tag = 'internal scratch']
  %s0 = inlined_call_operand.vmem [shape: f32[512,128], index: 0, kind: input, shape index: {}]
  %s1 = inlined_call_operand.vmem [shape: f32[128,128], index: 1, kind: input, shape index: {}]
  %s2 = inlined_call_operand.vmem [shape: f32[512,128], index: 2, kind: output, shape index: {0}]
  %s3 = inlined_call_operand.vmem [shape: f32[1,128], index: 3, kind: output, shape index: {1}]
  %s4 = inlined_call_operand.vmem [shape: f32[1,128], index: 4, kind: output, shape index: {2}]
  %5 = xla_tuple %s2, %s3, %s4
  %s6 = sld [smem:[#allocation0]]
  $region61: #{basic_conv2d.2} parent=0
    _
  %s8 = ssub.s32 1, %s6
  %s9 = scalar_select 0, %s8, %s6
  loop: start=0, step=1, limit=4
  $region2: #{basic_conv2d.2} parent=0 // loop_pre_header
    _
  $region3: #{basic_conv2d.2} parent=0 // loop_header
    %s11 = sphi 0, %s15
    %p12 = scmp.ge.s32.totalorder %s11, 4
    %s21 = sphi 0, %s23
    %s24 = sphi 0, %s21
    %s25 = sphi 0, %s24
    %s41 = sphi 0, %s25
    %s45 = sphi 0, %s45
    %s47 = sphi 0, %s45
    %s48 = sphi 0, %s47
    %s62 = sphi 0, %s48
    %s68 = sphi 0, %s70
    %s71 = sphi 0, %s68
    %s72 = sphi 0, %s71
    %s88 = sphi 0, %s72
    %s92 = sphi 0, %s92
    %s94 = sphi 0, %s92
    %s95 = sphi 0, %s94
    %s109 = sphi 0, %s95
    %s113 = sphi 0, %s113
    %s115 = sphi 0, %s113
    %s116 = sphi 0, %s115
    %s130 = sphi 0, %s116
  $region4: #{basic_conv2d.2} parent=0 // loop_header_branch
    %14 = sbr.rel (%p12) target = $region8
  $region5: #{basic_conv2d.2} parent=0 // loop_body
    %s16 = ssub.s32 %s11, 1
    %s17 = ssub.s32 %s11, 2
    %s18 = sadd.s32 %s11, 1
    %s19 = ssub.s32 %s11, %s18
    %p20 = scmp.eq.s32.totalorder %s19, 0
    %s22 = sadd.s32 %s21, 1
    %s23 = scalar_select %p20, %s21, %s22
    %p26 = pneg %p20
    %p27 = scmp.eq.s32.totalorder %s11, 1
    %p28 = por %p26, %p27
    %p29 = scmp.ne.s32.totalorder %s21, %s24
    %p30 = scmp.eq.s32.totalorder %s11, 0
    %p31 = por %p29, %p30
    %p32 = scmp.ne.s32.totalorder %s21, %s24
    %p33 = scmp.eq.s32.totalorder %s16, 1
    %p34 = por %p32, %p33
    %p35 = scmp.ne.s32.totalorder %s24, %s25
    %p36 = scmp.eq.s32.totalorder %s16, 0
    %p37 = por %p35, %p36
    %p38 = scmp.ne.s32.totalorder %s24, %s25
    %p39 = scmp.eq.s32.totalorder %s17, 1
    %p40 = por %p38, %p39
    %p42 = scmp.ne.s32.totalorder %s25, %s41
    %p43 = scmp.eq.s32.totalorder %s17, 0
    %p44 = por %p42, %p43
    %s46 = sadd.s32 %s45, 1
    %p49 = scmp.eq.s32.totalorder %s11, 1
    %p50 = scmp.ne.s32.totalorder %s45, %s47
    %p51 = scmp.eq.s32.totalorder %s11, 0
    %p52 = por %p50, %p51
    %p53 = scmp.ne.s32.totalorder %s45, %s47
    %p54 = scmp.eq.s32.totalorder %s16, 1
    %p55 = por %p53, %p54
    %p56 = scmp.ne.s32.totalorder %s47, %s48
    %p57 = scmp.eq.s32.totalorder %s16, 0
    %p58 = por %p56, %p57
    %p59 = scmp.ne.s32.totalorder %s47, %s48
    %p60 = scmp.eq.s32.totalorder %s17, 1
    %p61 = por %p59, %p60
    %p63 = scmp.ne.s32.totalorder %s48, %s62
    %p64 = scmp.eq.s32.totalorder %s17, 0
    %p65 = por %p63, %p64
    %s66 = ssub.s32 %s11, %s18
    %p67 = scmp.eq.s32.totalorder %s66, 0
    %s69 = sadd.s32 %s68, 1
    %s70 = scalar_select %p67, %s68, %s69
    %p73 = pneg %p67
    %p74 = scmp.eq.s32.totalorder %s11, 1
    %p75 = por %p73, %p74
    %p76 = scmp.ne.s32.totalorder %s68, %s71
    %p77 = scmp.eq.s32.totalorder %s11, 0
    %p78 = por %p76, %p77
    %p79 = scmp.ne.s32.totalorder %s68, %s71
    %p80 = scmp.eq.s32.totalorder %s16, 1
    %p81 = por %p79, %p80
    %p82 = scmp.ne.s32.totalorder %s71, %s72
    %p83 = scmp.eq.s32.totalorder %s16, 0
    %p84 = por %p82, %p83
    %p85 = scmp.ne.s32.totalorder %s71, %s72
    %p86 = scmp.eq.s32.totalorder %s17, 1
    %p87 = por %p85, %p86
    %p89 = scmp.ne.s32.totalorder %s72, %s88
    %p90 = scmp.eq.s32.totalorder %s17, 0
    %p91 = por %p89, %p90
    %s93 = sadd.s32 %s92, 1
    %p96 = scmp.eq.s32.totalorder %s11, 1
    %p97 = scmp.ne.s32.totalorder %s92, %s94
    %p98 = scmp.eq.s32.totalorder %s11, 0
    %p99 = por %p97, %p98
    %p100 = scmp.ne.s32.totalorder %s92, %s94
    %p101 = scmp.eq.s32.totalorder %s16, 1
    %p102 = por %p100, %p101
    %p103 = scmp.ne.s32.totalorder %s94, %s95
    %p104 = scmp.eq.s32.totalorder %s16, 0
    %p105 = por %p103, %p104
    %p106 = scmp.ne.s32.totalorder %s94, %s95
    %p107 = scmp.eq.s32.totalorder %s17, 1
    %p108 = por %p106, %p107
    %p110 = scmp.ne.s32.totalorder %s95, %s109
    %p111 = scmp.eq.s32.totalorder %s17, 0
    %p112 = por %p110, %p111
    %s114 = sadd.s32 %s113, 1
    %p117 = scmp.eq.s32.totalorder %s11, 1
    %p118 = scmp.ne.s32.totalorder %s113, %s115
    %p119 = scmp.eq.s32.totalorder %s11, 0
    %p120 = por %p118, %p119
    %p121 = scmp.ne.s32.totalorder %s113, %s115
    %p122 = scmp.eq.s32.totalorder %s16, 1
    %p123 = por %p121, %p122
    %p124 = scmp.ne.s32.totalorder %s115, %s116
    %p125 = scmp.eq.s32.totalorder %s16, 0
    %p126 = por %p124, %p125
    %p127 = scmp.ne.s32.totalorder %s115, %s116
    %p128 = scmp.eq.s32.totalorder %s17, 1
    %p129 = por %p127, %p128
    %p131 = scmp.ne.s32.totalorder %s116, %s130
    %p132 = scmp.eq.s32.totalorder %s17, 0
    %p133 = por %p131, %p132
    %p134 = scmp.le.s32.totalorder 1, %s11
    %p135 = scmp.lt.s32.totalorder %s11, 3
    %p136 = pnand %p134, %p135
    %p137 = pneg %p136
    // Predicated region
    $region9: #{basic_conv2d.2} parent=5 // pred_check
      _
    $region10: #{basic_conv2d.2} parent=5 // pred_check_branch
      %139 = sbr.rel (%p136) target = $region12
    $region11: #{basic_conv2d.2} parent=5 // pred_region
      %s140 = ssub.s32 %s11, 1
      // Predicated region
      $region13: #{basic_conv2d.2} parent=11 // pred_check
        %p141 = pneg %p58
      $region14: #{basic_conv2d.2} parent=11 // pred_check_branch
        %143 = sbr.rel (%p141) target = $region16
      $region15: #{basic_conv2d.2} parent=11 // pred_region
        _
      $region16: #{basic_conv2d.2} parent=11 // pred_fallthru
        _
    $region12: #{basic_conv2d.2} parent=5 // pred_fallthru
      _
    %p144 = scmp.lt.s32.totalorder %s11, 2
    // Predicated region
    $region17: #{basic_conv2d.2} parent=5 // pred_check
      %p145 = pneg %p144
    $region18: #{basic_conv2d.2} parent=5 // pred_check_branch
      %147 = sbr.rel (%p145) target = $region20
    $region19: #{basic_conv2d.2} parent=5 // pred_region
      // Predicated region
      $region21: #{basic_conv2d.2} parent=19 // pred_check
        %p148 = pneg %p31
      $region22: #{basic_conv2d.2} parent=19 // pred_check_branch
        %150 = sbr.rel (%p148) target = $region24
      $region23: #{basic_conv2d.2} parent=19 // pred_region
        %s151 = smul.u32 32, %s11
        %p152 = scmp.lt.s32.totalorder %s151, 63
        %s153 = scalar_select %p152, %s151, 63
        %s154 = smul.addr %s153, 8
        %s155 = scalar_lea.vmem %s0, %s154
        %s156 = smul.u32 32, %s11
      $region24: #{basic_conv2d.2} parent=19 // pred_fallthru
        _
    $region20: #{basic_conv2d.2} parent=5 // pred_fallthru
      _
    %p157 = scmp.le.s32.totalorder 1, %s11
    %p158 = scmp.lt.s32.totalorder %s11, 3
    %p159 = pnand %p157, %p158
    %p160 = pneg %p159
    // Predicated region
    $region25: #{basic_conv2d.2} parent=5 // pred_check
      _
    $region26: #{basic_conv2d.2} parent=5 // pred_check_branch
      %162 = sbr.rel (%p159) target = $region28
    $region27: #{basic_conv2d.2} parent=5 // pred_region
      %s163 = ssub.s32 %s11, 1
      %s164 = smul.u32 32, %s16
      %p165 = scmp.lt.s32.totalorder %s164, 63
      %s166 = scalar_select %p165, %s164, 63
      %s167 = smul.addr %s166, 8
      %s168 = scalar_lea.vmem %s0, %s167
      %p169 = pneg %p37
      %p170 = pneg %p34
      %p171 = pneg %p58
      %p172 = pneg %p55
      %p173 = pneg %p84
      %p174 = pneg %p81
      %s175 = smul.u32 32, %s16
      %p176 = scmp.lt.s32.totalorder %s175, 63
      %s177 = scalar_select %p176, %s175, 63
      %s178 = smul.addr %s177, 8
      %s179 = scalar_lea.vmem %s2, %s178
      %p180 = pneg %p105
      %p181 = pneg %p102
      %p182 = pneg %p126
      %p183 = pneg %p123
      %s184 = smul.u32 32, %s16
      %p185 = scmp.lt.s32.totalorder %s184, 63
      %s186 = scalar_select %p185, %s184, 63
      %s187 = smul.addr %s186, 8
      %s188 = scalar_lea.vmem %s0, %s187
      %s189 = smul.u32 32, %s16
      %s190 = smul.u32 32, %s16
      %p191 = scmp.lt.s32.totalorder %s190, 63
      %s192 = scalar_select %p191, %s190, 63
      %s193 = smul.addr %s192, 8
      %s194 = scalar_lea.vmem %s2, %s193
      %s195 = smul.u32 32, %s16
      %v196 = vld [vmem:[%s188] sm:$0xff]
      %v197 = vld [vmem:[%s188 + $0x8] sm:$0xff]
      %v198 = vld [vmem:[%s188 + $0x10] sm:$0xff]
      %v199 = vld [vmem:[%s188 + $0x18] sm:$0xff]
      %v200 = vld [vmem:[%s188 + $0x20] sm:$0xff]
      %v201 = vld [vmem:[%s188 + $0x28] sm:$0xff]
      %v202 = vld [vmem:[%s188 + $0x30] sm:$0xff]
      %v203 = vld [vmem:[%s188 + $0x38] sm:$0xff]
      %v204 = vld [vmem:[%s188 + $0x40] sm:$0xff]
      %v205 = vld [vmem:[%s188 + $0x48] sm:$0xff]
      %v206 = vld [vmem:[%s188 + $0x50] sm:$0xff]
      %v207 = vld [vmem:[%s188 + $0x58] sm:$0xff]
      %v208 = vld [vmem:[%s188 + $0x60] sm:$0xff]
      %v209 = vld [vmem:[%s188 + $0x68] sm:$0xff]
      %v210 = vld [vmem:[%s188 + $0x70] sm:$0xff]
      %v211 = vld [vmem:[%s188 + $0x78] sm:$0xff]
      %v212 = vld [vmem:[%s188 + $0x80] sm:$0xff]
      %v213 = vld [vmem:[%s188 + $0x88] sm:$0xff]
      %v214 = vld [vmem:[%s188 + $0x90] sm:$0xff]
      %v215 = vld [vmem:[%s188 + $0x98] sm:$0xff]
      %v216 = vld [vmem:[%s188 + $0xa0] sm:$0xff]
      %v217 = vld [vmem:[%s188 + $0xa8] sm:$0xff]
      %v218 = vld [vmem:[%s188 + $0xb0] sm:$0xff]
      %v219 = vld [vmem:[%s188 + $0xb8] sm:$0xff]
      %v220 = vld [vmem:[%s188 + $0xc0] sm:$0xff]
      %v221 = vld [vmem:[%s188 + $0xc8] sm:$0xff]
      %v222 = vld [vmem:[%s188 + $0xd0] sm:$0xff]
      %v223 = vld [vmem:[%s188 + $0xd8] sm:$0xff]
      %v224 = vld [vmem:[%s188 + $0xe0] sm:$0xff]
      %v225 = vld [vmem:[%s188 + $0xe8] sm:$0xff]
      %v226 = vld [vmem:[%s188 + $0xf0] sm:$0xff]
      %v227 = vld [vmem:[%s188 + $0xf8] sm:$0xff]
      %v228 = vld [vmem:[%s1] sm:$0xff]
      %v229 = vld [vmem:[%s1 + $0x8] sm:$0xff]
      %v230 = vld [vmem:[%s1 + $0x10] sm:$0xff]
      %v231 = vld [vmem:[%s1 + $0x18] sm:$0xff]
      %v232 = vld [vmem:[%s1 + $0x20] sm:$0xff]
      %v233 = vld [vmem:[%s1 + $0x28] sm:$0xff]
      %v234 = vld [vmem:[%s1 + $0x30] sm:$0xff]
      %v235 = vld [vmem:[%s1 + $0x38] sm:$0xff]
      %v236 = vld [vmem:[%s1 + $0x40] sm:$0xff]
      %v237 = vld [vmem:[%s1 + $0x48] sm:$0xff]
      %v238 = vld [vmem:[%s1 + $0x50] sm:$0xff]
      %v239 = vld [vmem:[%s1 + $0x58] sm:$0xff]
      %v240 = vld [vmem:[%s1 + $0x60] sm:$0xff]
      %v241 = vld [vmem:[%s1 + $0x68] sm:$0xff]
      %v242 = vld [vmem:[%s1 + $0x70] sm:$0xff]
      %v243 = vld [vmem:[%s1 + $0x78] sm:$0xff]
      %244 = vmatprep.subr.mxu0 0.0
      %245 = vmatpush1.msra.mxu0 %v228
      %246 = vmatprep.subr.mxu0 0.0
      %247 = vmatpush1.msra.mxu0 %v229
      %248 = vmatprep.subr.mxu0 0.0
      %249 = vmatpush1.msra.mxu0 %v230
      %250 = vmatprep.subr.mxu0 0.0
      %251 = vmatpush1.msra.mxu0 %v231
      %252 = vmatprep.subr.mxu0 0.0
      %253 = vmatpush1.msra.mxu0 %v232
      %254 = vmatprep.subr.mxu0 0.0
      %255 = vmatpush1.msra.mxu0 %v233
      %256 = vmatprep.subr.mxu0 0.0
      %257 = vmatpush1.msra.mxu0 %v234
      %258 = vmatprep.subr.mxu0 0.0
      %259 = vmatpush1.msra.mxu0 %v235
      %260 = vmatprep.subr.mxu0 0.0
      %261 = vmatpush1.msra.mxu0 %v236
      %262 = vmatprep.subr.mxu0 0.0
      %263 = vmatpush1.msra.mxu0 %v237
      %264 = vmatprep.subr.mxu0 0.0
      %265 = vmatpush1.msra.mxu0 %v238
      %266 = vmatprep.subr.mxu0 0.0
      %267 = vmatpush1.msra.mxu0 %v239
      %268 = vmatprep.subr.mxu0 0.0
      %269 = vmatpush1.msra.mxu0 %v240
      %270 = vmatprep.subr.mxu0 0.0
      %271 = vmatpush1.msra.mxu0 %v241
      %272 = vmatprep.subr.mxu0 0.0
      %273 = vmatpush1.msra.mxu0 %v242
      %274 = vmatprep.subr.mxu0 0.0
      %275 = vmatpush1.msra.mxu0 %v243
      %276 = vmatprep.subr.mxu0 0.0
      %277 = vmatpush1.msra.mxu0 0.0
      %278 = vmatprep.subr.mxu0 0.0
      %279 = vmatpush1.msra.mxu0 0.0
      %280 = vmatprep.subr.mxu0 0.0
      %281 = vmatpush1.msra.mxu0 0.0
      %282 = vmatprep.subr.mxu0 0.0
      %283 = vmatpush1.msra.mxu0 0.0
      %284 = vmatprep.subr.mxu0 0.0
      %285 = vmatpush1.msra.mxu0 0.0
      %286 = vmatprep.subr.mxu0 0.0
      %287 = vmatpush1.msra.mxu0 0.0
      %288 = vmatprep.subr.mxu0 0.0
      %289 = vmatpush1.msra.mxu0 0.0
      %290 = vmatprep.subr.mxu0 0.0
      %291 = vmatpush1.msra.mxu0 0.0
      %292 = vmatprep.subr.mxu0 0.0
      %293 = vmatpush1.msra.mxu0 0.0
      %294 = vmatprep.subr.mxu0 0.0
      %295 = vmatpush1.msra.mxu0 0.0
      %296 = vmatprep.subr.mxu0 0.0
      %297 = vmatpush1.msra.mxu0 0.0
      %298 = vmatprep.subr.mxu0 0.0
      %299 = vmatpush1.msra.mxu0 0.0
      %300 = vmatprep.subr.mxu0 0.0
      %301 = vmatpush1.msra.mxu0 0.0
      %302 = vmatprep.subr.mxu0 0.0
      %303 = vmatpush1.msra.mxu0 0.0
      %304 = vmatprep.subr.mxu0 0.0
      %305 = vmatpush1.msra.mxu0 0.0
      %306 = vmatprep.subr.mxu0 0.0
      %307 = vmatpush1.msra.mxu0 0.0
      %308 = vmatprep.mubr.f32.mxu0 0.0
      %309 = vmatmul.mubr.f32.gmra.mrb[0].mxu0 %v196
      %v310 = vpop.f32.mrb[0].mxu0
      %v311 = vadd.f32 0.0, %v310
      %v312 = vpop.f32.mrb[0].mxu0
      %313 = vmatprep.mubr.f32.mxu0 0.0
      %314 = vmatmul.mubr.f32.gmra.mrb[0].mxu0 %v197
      %v315 = vpop.f32.mrb[0].mxu0
      %v316 = vadd.f32 0.0, %v315
      %v317 = vpop.f32.mrb[0].mxu0
      %318 = vmatprep.mubr.f32.mxu0 0.0
      %319 = vmatmul.mubr.f32.gmra.mrb[0].mxu0 %v198
      %v320 = vpop.f32.mrb[0].mxu0
      %v321 = vadd.f32 0.0, %v320
      %v322 = vpop.f32.mrb[0].mxu0
      %323 = vmatprep.mubr.f32.mxu0 0.0
      %324 = vmatmul.mubr.f32.gmra.mrb[0].mxu0 %v199
      %v325 = vpop.f32.mrb[0].mxu0
      %v326 = vadd.f32 0.0, %v325
      %v327 = vpop.f32.mrb[0].mxu0
      %328 = vmatprep.mubr.f32.mxu0 0.0
      %329 = vmatmul.mubr.f32.gmra.mrb[0].mxu0 %v200
      %v330 = vpop.f32.mrb[0].mxu0
      %v331 = vadd.f32 0.0, %v330
      %v332 = vpop.f32.mrb[0].mxu0
      %333 = vmatprep.mubr.f32.mxu0 0.0
      %334 = vmatmul.mubr.f32.gmra.mrb[0].mxu0 %v201
      %v335 = vpop.f32.mrb[0].mxu0
      %v336 = vadd.f32 0.0, %v335
      %v337 = vpop.f32.mrb[0].mxu0
      %338 = vmatprep.mubr.f32.mxu0 0.0
      %339 = vmatmul.mubr.f32.gmra.mrb[0].mxu0 %v202
      %v340 = vpop.f32.mrb[0].mxu0
      %v341 = vadd.f32 0.0, %v340
      %v342 = vpop.f32.mrb[0].mxu0
      %343 = vmatprep.mubr.f32.mxu0 0.0
      %344 = vmatmul.mubr.f32.gmra.mrb[0].mxu0 %v203
      %v345 = vpop.f32.mrb[0].mxu0
      %v346 = vadd.f32 0.0, %v345
      %v347 = vpop.f32.mrb[0].mxu0
      %348 = vmatprep.mubr.f32.mxu0 0.0
      %349 = vmatmul.mubr.f32.gmra.mrb[0].mxu0 %v204
      %v350 = vpop.f32.mrb[0].mxu0
      %v351 = vadd.f32 0.0, %v350
      %v352 = vpop.f32.mrb[0].mxu0
      %353 = vmatprep.mubr.f32.mxu0 0.0
      %354 = vmatmul.mubr.f32.gmra.mrb[0].mxu0 %v205
      %v355 = vpop.f32.mrb[0].mxu0
      %v356 = vadd.f32 0.0, %v355
      %v357 = vpop.f32.mrb[0].mxu0
      %358 = vmatprep.mubr.f32.mxu0 0.0
      %359 = vmatmul.mubr.f32.gmra.mrb[0].mxu0 %v206
      %v360 = vpop.f32.mrb[0].mxu0
      %v361 = vadd.f32 0.0, %v360
      %v362 = vpop.f32.mrb[0].mxu0
      %363 = vmatprep.mubr.f32.mxu0 0.0
      %364 = vmatmul.mubr.f32.gmra.mrb[0].mxu0 %v207
      %v365 = vpop.f32.mrb[0].mxu0
      %v366 = vadd.f32 0.0, %v365
      %v367 = vpop.f32.mrb[0].mxu0
      %368 = vmatprep.mubr.f32.mxu0 0.0
      %369 = vmatmul.mubr.f32.gmra.mrb[0].mxu0 %v208
      %v370 = vpop.f32.mrb[0].mxu0
      %v371 = vadd.f32 0.0, %v370
      %v372 = vpop.f32.mrb[0].mxu0
      %373 = vmatprep.mubr.f32.mxu0 0.0
      %374 = vmatmul.mubr.f32.gmra.mrb[0].mxu0 %v209
      %v375 = vpop.f32.mrb[0].mxu0
      %v376 = vadd.f32 0.0, %v375
      %v377 = vpop.f32.mrb[0].mxu0
      %378 = vmatprep.mubr.f32.mxu0 0.0
      %379 = vmatmul.mubr.f32.gmra.mrb[0].mxu0 %v210
      %v380 = vpop.f32.mrb[0].mxu0
      %v381 = vadd.f32 0.0, %v380
      %v382 = vpop.f32.mrb[0].mxu0
      %383 = vmatprep.mubr.f32.mxu0 0.0
      %384 = vmatmul.mubr.f32.gmra.mrb[0].mxu0 %v211
      %v385 = vpop.f32.mrb[0].mxu0
      %v386 = vadd.f32 0.0, %v385
      %v387 = vpop.f32.mrb[0].mxu0
      %388 = vmatprep.mubr.f32.mxu0 0.0
      %389 = vmatmul.mubr.f32.gmra.mrb[0].mxu0 %v212
      %v390 = vpop.f32.mrb[0].mxu0
      %v391 = vadd.f32 0.0, %v390
      %v392 = vpop.f32.mrb[0].mxu0
      %393 = vmatprep.mubr.f32.mxu0 0.0
      %394 = vmatmul.mubr.f32.gmra.mrb[0].mxu0 %v213
      %v395 = vpop.f32.mrb[0].mxu0
      %v396 = vadd.f32 0.0, %v395
      %v397 = vpop.f32.mrb[0].mxu0
      %398 = vmatprep.mubr.f32.mxu0 0.0
      %399 = vmatmul.mubr.f32.gmra.mrb[0].mxu0 %v214
      %v400 = vpop.f32.mrb[0].mxu0
      %v401 = vadd.f32 0.0, %v400
      %v402 = vpop.f32.mrb[0].mxu0
      %403 = vmatprep.mubr.f32.mxu0 0.0
      %404 = vmatmul.mubr.f32.gmra.mrb[0].mxu0 %v215
      %v405 = vpop.f32.mrb[0].mxu0
      %v406 = vadd.f32 0.0, %v405
      %v407 = vpop.f32.mrb[0].mxu0
      %408 = vmatprep.mubr.f32.mxu0 0.0
      %409 = vmatmul.mubr.f32.gmra.mrb[0].mxu0 %v216
      %v410 = vpop.f32.mrb[0].mxu0
      %v411 = vadd.f32 0.0, %v410
      %v412 = vpop.f32.mrb[0].mxu0
      %413 = vmatprep.mubr.f32.mxu0 0.0
      %414 = vmatmul.mubr.f32.gmra.mrb[0].mxu0 %v217
      %v415 = vpop.f32.mrb[0].mxu0
      %v416 = vadd.f32 0.0, %v415
      %v417 = vpop.f32.mrb[0].mxu0
      %418 = vmatprep.mubr.f32.mxu0 0.0
      %419 = vmatmul.mubr.f32.gmra.mrb[0].mxu0 %v218
      %v420 = vpop.f32.mrb[0].mxu0
      %v421 = vadd.f32 0.0, %v420
      %v422 = vpop.f32.mrb[0].mxu0
      %423 = vmatprep.mubr.f32.mxu0 0.0
      %424 = vmatmul.mubr.f32.gmra.mrb[0].mxu0 %v219
      %v425 = vpop.f32.mrb[0].mxu0
      %v426 = vadd.f32 0.0, %v425
      %v427 = vpop.f32.mrb[0].mxu0
      %428 = vmatprep.mubr.f32.mxu0 0.0
      %429 = vmatmul.mubr.f32.gmra.mrb[0].mxu0 %v220
      %v430 = vpop.f32.mrb[0].mxu0
      %v431 = vadd.f32 0.0, %v430
      %v432 = vpop.f32.mrb[0].mxu0
      %433 = vmatprep.mubr.f32.mxu0 0.0
      %434 = vmatmul.mubr.f32.gmra.mrb[0].mxu0 %v221
      %v435 = vpop.f32.mrb[0].mxu0
      %v436 = vadd.f32 0.0, %v435
      %v437 = vpop.f32.mrb[0].mxu0
      %438 = vmatprep.mubr.f32.mxu0 0.0
      %439 = vmatmul.mubr.f32.gmra.mrb[0].mxu0 %v222
      %v440 = vpop.f32.mrb[0].mxu0
      %v441 = vadd.f32 0.0, %v440
      %v442 = vpop.f32.mrb[0].mxu0
      %443 = vmatprep.mubr.f32.mxu0 0.0
      %444 = vmatmul.mubr.f32.gmra.mrb[0].mxu0 %v223
      %v445 = vpop.f32.mrb[0].mxu0
      %v446 = vadd.f32 0.0, %v445
      %v447 = vpop.f32.mrb[0].mxu0
      %448 = vmatprep.mubr.f32.mxu0 0.0
      %449 = vmatmul.mubr.f32.gmra.mrb[0].mxu0 %v224
      %v450 = vpop.f32.mrb[0].mxu0
      %v451 = vadd.f32 0.0, %v450
      %v452 = vpop.f32.mrb[0].mxu0
      %453 = vmatprep.mubr.f32.mxu0 0.0
      %454 = vmatmul.mubr.f32.gmra.mrb[0].mxu0 %v225
      %v455 = vpop.f32.mrb[0].mxu0
      %v456 = vadd.f32 0.0, %v455
      %v457 = vpop.f32.mrb[0].mxu0
      %458 = vmatprep.mubr.f32.mxu0 0.0
      %459 = vmatmul.mubr.f32.gmra.mrb[0].mxu0 %v226
      %v460 = vpop.f32.mrb[0].mxu0
      %v461 = vadd.f32 0.0, %v460
      %v462 = vpop.f32.mrb[0].mxu0
      %463 = vmatprep.mubr.f32.mxu0 0.0
      %464 = vmatmul.mubr.f32.gmra.mrb[0].mxu0 %v227
      %v465 = vpop.f32.mrb[0].mxu0
      %v466 = vadd.f32 0.0, %v465
      %v467 = vpop.f32.mrb[0].mxu0
      %468 = vdwg.mxu0
      %469 = vst [vmem:[%s194] sm:$0xff] %v311
      %470 = vst [vmem:[%s194 + $0x8] sm:$0xff] %v316
      %471 = vst [vmem:[%s194 + $0x10] sm:$0xff] %v321
      %472 = vst [vmem:[%s194 + $0x18] sm:$0xff] %v326
      %473 = vst [vmem:[%s194 + $0x20] sm:$0xff] %v331
      %474 = vst [vmem:[%s194 + $0x28] sm:$0xff] %v336
      %475 = vst [vmem:[%s194 + $0x30] sm:$0xff] %v341
      %476 = vst [vmem:[%s194 + $0x38] sm:$0xff] %v346
      %477 = vst [vmem:[%s194 + $0x40] sm:$0xff] %v351
      %478 = vst [vmem:[%s194 + $0x48] sm:$0xff] %v356
      %479 = vst [vmem:[%s194 + $0x50] sm:$0xff] %v361
      %480 = vst [vmem:[%s194 + $0x58] sm:$0xff] %v366
      %481 = vst [vmem:[%s194 + $0x60] sm:$0xff] %v371
      %482 = vst [vmem:[%s194 + $0x68] sm:$0xff] %v376
      %483 = vst [vmem:[%s194 + $0x70] sm:$0xff] %v381
      %484 = vst [vmem:[%s194 + $0x78] sm:$0xff] %v386
      %485 = vst [vmem:[%s194 + $0x80] sm:$0xff] %v391
      %486 = vst [vmem:[%s194 + $0x88] sm:$0xff] %v396
      %487 = vst [vmem:[%s194 + $0x90] sm:$0xff] %v401
      %488 = vst [vmem:[%s194 + $0x98] sm:$0xff] %v406
      %489 = vst [vmem:[%s194 + $0xa0] sm:$0xff] %v411
      %490 = vst [vmem:[%s194 + $0xa8] sm:$0xff] %v416
      %491 = vst [vmem:[%s194 + $0xb0] sm:$0xff] %v421
      %492 = vst [vmem:[%s194 + $0xb8] sm:$0xff] %v426
      %493 = vst [vmem:[%s194 + $0xc0] sm:$0xff] %v431
      %494 = vst [vmem:[%s194 + $0xc8] sm:$0xff] %v436
      %495 = vst [vmem:[%s194 + $0xd0] sm:$0xff] %v441
      %496 = vst [vmem:[%s194 + $0xd8] sm:$0xff] %v446
      %497 = vst [vmem:[%s194 + $0xe0] sm:$0xff] %v451
      %498 = vst [vmem:[%s194 + $0xe8] sm:$0xff] %v456
      %499 = vst [vmem:[%s194 + $0xf0] sm:$0xff] %v461
      %500 = vst [vmem:[%s194 + $0xf8] sm:$0xff] %v466
      %p501 = scmp.eq.s32.totalorder %s16, 0
      // Predicated region
      $region29: #{basic_conv2d.2} parent=27 // pred_check
        %p502 = pneg %p501
      $region30: #{basic_conv2d.2} parent=27 // pred_check_branch
        %504 = sbr.rel (%p502) target = $region32
      $region31: #{basic_conv2d.2} parent=27 // pred_region
        %505 = vst [vmem:[%s3] sm:$0x1] 0.0
        %506 = vst [vmem:[%s4] sm:$0x1] 0.0
      $region32: #{basic_conv2d.2} parent=27 // pred_fallthru
        _
      %v507 = vld [vmem:[%s3] sm:$0x1]
      %v508 = vadd.f32 %v311, %v316
      %v509 = vadd.f32 %v508, %v321
      %v510 = vadd.f32 %v509, %v326
      %v511 = vadd.f32 %v510, %v331
      %v512 = vadd.f32 %v511, %v336
      %v513 = vadd.f32 %v512, %v341
      %v514 = vadd.f32 %v513, %v346
      %v515 = vadd.f32 %v514, %v351
      %v516 = vadd.f32 %v515, %v356
      %v517 = vadd.f32 %v516, %v361
      %v518 = vadd.f32 %v517, %v366
      %v519 = vadd.f32 %v518, %v371
      %v520 = vadd.f32 %v519, %v376
      %v521 = vadd.f32 %v520, %v381
      %v522 = vadd.f32 %v521, %v386
      %v523 = vadd.f32 %v522, %v391
      %v524 = vadd.f32 %v523, %v396
      %v525 = vadd.f32 %v524, %v401
      %v526 = vadd.f32 %v525, %v406
      %v527 = vadd.f32 %v526, %v411
      %v528 = vadd.f32 %v527, %v416
      %v529 = vadd.f32 %v528, %v421
      %v530 = vadd.f32 %v529, %v426
      %v531 = vadd.f32 %v530, %v431
      %v532 = vadd.f32 %v531, %v436
      %v533 = vadd.f32 %v532, %v441
      %v534 = vadd.f32 %v533, %v446
      %v535 = vadd.f32 %v534, %v451
      %v536 = vadd.f32 %v535, %v456
      %v537 = vadd.f32 %v536, %v461
      %v538 = vadd.f32 %v537, %v466
      %v539 = vrot.slane %v538, 4
      %v540 = vadd.f32 %v538, %v539
      %v541 = vrot.slane %v540, 2
      %v542 = vadd.f32 %v540, %v541
      %v543 = vrot.slane %v542, 1
      %v544 = vadd.f32 %v542, %v543
      %v545 = vadd.f32 %v507, %v544
      %546 = vst [vmem:[%s3] sm:$0x1] %v545
      %v547 = vld [vmem:[%s4] sm:$0x1]
      %v548 = vmul.f32 %v311, %v311
      %v549 = vmul.f32 %v316, %v316
      %v550 = vmul.f32 %v321, %v321
      %v551 = vmul.f32 %v326, %v326
      %v552 = vmul.f32 %v331, %v331
      %v553 = vmul.f32 %v336, %v336
      %v554 = vmul.f32 %v341, %v341
      %v555 = vmul.f32 %v346, %v346
      %v556 = vmul.f32 %v351, %v351
      %v557 = vmul.f32 %v356, %v356
      %v558 = vmul.f32 %v361, %v361
      %v559 = vmul.f32 %v366, %v366
      %v560 = vmul.f32 %v371, %v371
      %v561 = vmul.f32 %v376, %v376
      %v562 = vmul.f32 %v381, %v381
      %v563 = vmul.f32 %v386, %v386
      %v564 = vmul.f32 %v391, %v391
      %v565 = vmul.f32 %v396, %v396
      %v566 = vmul.f32 %v401, %v401
      %v567 = vmul.f32 %v406, %v406
      %v568 = vmul.f32 %v411, %v411
      %v569 = vmul.f32 %v416, %v416
      %v570 = vmul.f32 %v421, %v421
      %v571 = vmul.f32 %v426, %v426
      %v572 = vmul.f32 %v431, %v431
      %v573 = vmul.f32 %v436, %v436
      %v574 = vmul.f32 %v441, %v441
      %v575 = vmul.f32 %v446, %v446
      %v576 = vmul.f32 %v451, %v451
      %v577 = vmul.f32 %v456, %v456
      %v578 = vmul.f32 %v461, %v461
      %v579 = vmul.f32 %v466, %v466
      %v580 = vadd.f32 %v548, %v549
      %v581 = vadd.f32 %v580, %v550
      %v582 = vadd.f32 %v581, %v551
      %v583 = vadd.f32 %v582, %v552
      %v584 = vadd.f32 %v583, %v553
      %v585 = vadd.f32 %v584, %v554
      %v586 = vadd.f32 %v585, %v555
      %v587 = vadd.f32 %v586, %v556
      %v588 = vadd.f32 %v587, %v557
      %v589 = vadd.f32 %v588, %v558
      %v590 = vadd.f32 %v589, %v559
      %v591 = vadd.f32 %v590, %v560
      %v592 = vadd.f32 %v591, %v561
      %v593 = vadd.f32 %v592, %v562
      %v594 = vadd.f32 %v593, %v563
      %v595 = vadd.f32 %v594, %v564
      %v596 = vadd.f32 %v595, %v565
      %v597 = vadd.f32 %v596, %v566
      %v598 = vadd.f32 %v597, %v567
      %v599 = vadd.f32 %v598, %v568
      %v600 = vadd.f32 %v599, %v569
      %v601 = vadd.f32 %v600, %v570
      %v602 = vadd.f32 %v601, %v571
      %v603 = vadd.f32 %v602, %v572
      %v604 = vadd.f32 %v603, %v573
      %v605 = vadd.f32 %v604, %v574
      %v606 = vadd.f32 %v605, %v575
      %v607 = vadd.f32 %v606, %v576
      %v608 = vadd.f32 %v607, %v577
      %v609 = vadd.f32 %v608, %v578
      %v610 = vadd.f32 %v609, %v579
      %v611 = vrot.slane %v610, 4
      %v612 = vadd.f32 %v610, %v611
      %v613 = vrot.slane %v612, 2
      %v614 = vadd.f32 %v612, %v613
      %v615 = vrot.slane %v614, 1
      %v616 = vadd.f32 %v614, %v615
      %v617 = vadd.f32 %v547, %v616
      %618 = vst [vmem:[%s4] sm:$0x1] %v617
      %s619 = smul.u32 32, %s16
      %p620 = scmp.lt.s32.totalorder %s619, 63
      %s621 = scalar_select %p620, %s619, 63
      %s622 = smul.addr %s621, 8
      %s623 = scalar_lea.vmem %s2, %s622
      // Predicated region
      $region33: #{basic_conv2d.2} parent=27 // pred_check
        %p624 = pneg %p81
      $region34: #{basic_conv2d.2} parent=27 // pred_check_branch
        %626 = sbr.rel (%p624) target = $region36
      $region35: #{basic_conv2d.2} parent=27 // pred_region
        %s627 = smul.u32 32, %s16
      $region36: #{basic_conv2d.2} parent=27 // pred_fallthru
        _
      // Predicated region
      $region37: #{basic_conv2d.2} parent=27 // pred_check
        %p628 = pneg %p102
      $region38: #{basic_conv2d.2} parent=27 // pred_check_branch
        %630 = sbr.rel (%p628) target = $region40
      $region39: #{basic_conv2d.2} parent=27 // pred_region
        _
      $region40: #{basic_conv2d.2} parent=27 // pred_fallthru
        _
      // Predicated region
      $region41: #{basic_conv2d.2} parent=27 // pred_check
        %p631 = pneg %p123
      $region42: #{basic_conv2d.2} parent=27 // pred_check_branch
        %633 = sbr.rel (%p631) target = $region44
      $region43: #{basic_conv2d.2} parent=27 // pred_region
        _
      $region44: #{basic_conv2d.2} parent=27 // pred_fallthru
        _
      // Predicated region
      $region45: #{basic_conv2d.2} parent=27 // pred_check
        %p634 = pneg %p102
      $region46: #{basic_conv2d.2} parent=27 // pred_check_branch
        %636 = sbr.rel (%p634) target = $region48
      $region47: #{basic_conv2d.2} parent=27 // pred_region
        _
      $region48: #{basic_conv2d.2} parent=27 // pred_fallthru
        _
      // Predicated region
      $region49: #{basic_conv2d.2} parent=27 // pred_check
        %p637 = pneg %p123
      $region50: #{basic_conv2d.2} parent=27 // pred_check_branch
        %639 = sbr.rel (%p637) target = $region52
      $region51: #{basic_conv2d.2} parent=27 // pred_region
        _
      $region52: #{basic_conv2d.2} parent=27 // pred_fallthru
        _
    $region28: #{basic_conv2d.2} parent=5 // pred_fallthru
      _
    %p640 = scmp.le.s32.totalorder 2, %s11
    // Predicated region
    $region53: #{basic_conv2d.2} parent=5 // pred_check
      %p641 = pneg %p640
    $region54: #{basic_conv2d.2} parent=5 // pred_check_branch
      %643 = sbr.rel (%p641) target = $region56
    $region55: #{basic_conv2d.2} parent=5 // pred_region
      %s644 = ssub.s32 %s11, 2
      // Predicated region
      $region57: #{basic_conv2d.2} parent=55 // pred_check
        %p645 = pneg %p87
      $region58: #{basic_conv2d.2} parent=55 // pred_check_branch
        %647 = sbr.rel (%p645) target = $region60
      $region59: #{basic_conv2d.2} parent=55 // pred_region
        %s648 = smul.u32 32, %s17
        %p649 = scmp.lt.s32.totalorder %s648, 63
        %s650 = scalar_select %p649, %s648, 63
        %s651 = smul.addr %s650, 8
        %s652 = scalar_lea.vmem %s2, %s651
      $region60: #{basic_conv2d.2} parent=55 // pred_fallthru
        _
    $region56: #{basic_conv2d.2} parent=5 // pred_fallthru
      _
  $region6: #{basic_conv2d.2} parent=0 // loop_footer
    %s15 = sadd.s32 1, %s11
  $region7: #{basic_conv2d.2} parent=0 // loop_footer_branch
    %10 = sbr.rel target = $region3
  $region8: #{basic_conv2d.2} parent=0 // loop_exit
    _

</llo_original>
